<compile_context>
chip_gen: v7x
topology: tpu7x:2x2x1
jax: 0.10.0
libtpu: 0.0.40
codegen_flags: <defaults>
</compile_context>

<pallas_src>
import functools

import numpy as np
import jax
import jax.numpy as jnp
from jax import lax
from jax.experimental import pallas as pl
from jax.experimental.pallas import tpu as pltpu

LANE = 128  # TPU vreg lane width (last dim)
_GELU_C = float(np.sqrt(2.0 / np.pi))


# ----------------------------------------------------------------------------
# Activations (same formulas in kernel epilogue and pure-JAX reference).
# ----------------------------------------------------------------------------
def _gelu(x):
    # tanh-approximate GELU; exact-erf nn.GELU differs by <1e-3 here.
    return 0.5 * x * (1.0 + jnp.tanh(_GELU_C * (x + 0.044715 * x * x * x)))


def _silu(x):
    return x * (1.0 / (1.0 + jnp.exp(-x)))


def _round_up(x, m):
    return ((x + m - 1) // m) * m


def _largest_divisor_tile(dim, unit, cap):
    """dim is a multiple of `unit`; largest multiple of `unit` <= cap dividing dim."""
    t = max(unit, min(dim, (cap // unit) * unit))
    while dim % t:
        t -= unit
    return t


# ----------------------------------------------------------------------------
# Pallas linear kernels:  y = activation(x @ W^T + b)
# ----------------------------------------------------------------------------
def _linear_k1_kernel(x_ref, w_ref, b_ref, o_ref, *, activation):
    """Single-K-step specialization: no accumulator scratch, no init, no RMW."""
    y = jnp.dot(x_ref[...], w_ref[...], preferred_element_type=jnp.float32)
    y = y + b_ref[...]
    if activation == "gelu":
        y = _gelu(y)
    elif activation == "silu":
        y = _silu(y)
    o_ref[...] = y.astype(o_ref.dtype)


def _linear_acc_kernel(x_ref, w_ref, b_ref, o_ref, acc_ref, *, activation):
    """General path: K-blocked with a VMEM f32 accumulator (init/finalize via pl.when)."""
    k = pl.program_id(2)

    @pl.when(k == 0)
    def _init():
        acc_ref[...] = jnp.zeros_like(acc_ref)

    acc_ref[...] += jnp.dot(x_ref[...], w_ref[...], preferred_element_type=jnp.float32)

    @pl.when(k == pl.num_programs(2) - 1)
    def _finalize():
        y = acc_ref[...] + b_ref[...]
        if activation == "gelu":
            y = _gelu(y)
        elif activation == "silu":
            y = _silu(y)
        o_ref[...] = y.astype(o_ref.dtype)


def prepare_linear(weight, bias, compute_dtype=jnp.float32):
    """One-time weight prep (PyTorch layout weight [N, K], bias [N]).

    Transposes to (K, N) and zero-pads K and N up to multiples of 128 lanes,
    so the forward pass never re-transposes or re-pads weights/biases.
    """
    N, K = weight.shape
    Kp, Np = _round_up(K, LANE), _round_up(N, LANE)
    w_t = jnp.pad(weight.astype(jnp.float32).T, ((0, Kp - K), (0, Np - N)))
    b = jnp.pad(bias.astype(jnp.float32).reshape(1, N), ((0, 0), (0, Np - N)))
    return {"w_t": w_t.astype(compute_dtype), "b": b, "n": N, "k": K}


def linear_prepped(x, prep, activation=None, *, tm=256, tn=256, tk=512,
                   split_for_megacore=True):
    """y = act(x @ W^T + b) with W pre-transposed/pre-padded by prepare_linear.

    x: [..., K] or [..., Kp] (lane-padded).  Returns [..., Np] lane-padded f32;
    padded output lanes are act(0) == 0 for identity / GELU / SiLU.
    """
    w_t, b = prep["w_t"], prep["b"]
    Kp, Np = w_t.shape
    *lead, Kx = x.shape
    M = int(np.prod(lead)) if lead else 1

    x2 = x.reshape(M, Kx)
    if x2.dtype != w_t.dtype:
        x2 = x2.astype(w_t.dtype)
    if Kx != Kp:  # only the boundary call (n_dim=4 input) needs a K pad
        x2 = jnp.pad(x2, ((0, 0), (0, Kp - Kx)))

    sub = 16 if w_t.dtype == jnp.bfloat16 else 8  # sublane packing unit
    Mp = _round_up(M, sub)
    if Mp != M:
        x2 = jnp.pad(x2, ((0, Mp - M), (0, 0)))

    tile_m = _largest_divisor_tile(Mp, sub, tm)
    tile_n = _largest_divisor_tile(Np, LANE, tn)
    tile_k = _largest_divisor_tile(Kp, LANE, tk)

    # v7x megacore: ensure a "parallel" grid axis has extent >= 2 when the
    # whole problem would otherwise be a single block.
    if (split_for_megacore and Mp // tile_m == 1 and Np // tile_n == 1
            and Mp % (2 * sub) == 0):
        tile_m = Mp // 2

    kM, kN, kK = Mp // tile_m, Np // tile_n, Kp // tile_k

    if kK == 1:
        y = pl.pallas_call(
            functools.partial(_linear_k1_kernel, activation=activation),
            out_shape=jax.ShapeDtypeStruct((Mp, Np), jnp.float32),
            grid_spec=pltpu.PrefetchScalarGridSpec(
                num_scalar_prefetch=0,
                grid=(kM, kN),
                in_specs=[
                    pl.BlockSpec((tile_m, Kp), lambda i, j: (i, 0)),   # x tile
                    pl.BlockSpec((Kp, tile_n), lambda i, j: (0, j)),   # W^T tile
                    pl.BlockSpec((1, tile_n), lambda i, j: (0, j)),    # bias tile
                ],
                out_specs=pl.BlockSpec((tile_m, tile_n), lambda i, j: (i, j)),
            ),
            compiler_params=pltpu.CompilerParams(
                dimension_semantics=("parallel", "parallel"),
            ),
        )(x2, w_t, b)
    else:
        # K is the last ("arbitrary") grid axis.  Tile set (256,256,512) f32
        # stays well under scoped-VMEM defaults on v5e/v6e/v7x.
        # TODO(synk): for much larger K, sweep pipeline_mode=pl.Buffered(3) on
        # the W^T BlockSpec and set vmem_limit_bytes if tiles are enlarged.
        y = pl.pallas_call(
            functools.partial(_linear_acc_kernel, activation=activation),
            out_shape=jax.ShapeDtypeStruct((Mp, Np), jnp.float32),
            grid_spec=pltpu.PrefetchScalarGridSpec(
                num_scalar_prefetch=0,
                grid=(kM, kN, kK),
                in_specs=[
                    pl.BlockSpec((tile_m, tile_k), lambda i, j, k: (i, k)),
                    pl.BlockSpec((tile_k, tile_n), lambda i, j, k: (k, j)),
                    pl.BlockSpec((1, tile_n), lambda i, j, k: (0, j)),
                ],
                out_specs=pl.BlockSpec((tile_m, tile_n), lambda i, j, k: (i, j)),
                scratch_shapes=[pltpu.VMEM((tile_m, tile_n), jnp.float32)],
            ),
            compiler_params=pltpu.CompilerParams(
                dimension_semantics=("parallel", "parallel", "arbitrary"),
            ),
        )(x2, w_t, b)

    if Mp != M:
        y = y[:M]
    return y.reshape(*lead, Np)


def linear_ref(x, weight, bias, activation=None):
    """Pure-JAX reference (f32-exact einsum) with identical semantics."""
    y = jnp.einsum("...k,nk->...n", x, weight,
                   precision=lax.Precision.HIGHEST) + bias
    if activation == "gelu":
        y = _gelu(y)
    elif activation == "silu":
        y = _silu(y)
    return y


# ----------------------------------------------------------------------------
# Shared tiny glue ops
# ----------------------------------------------------------------------------
def gaussian_fourier_projection(t, W):
    # TODO(synk): tiny elementwise sin/cos feature map kept in plain JAX (no matmul).
    x_proj = t[:, None] * W[None, :] * (2.0 * np.pi)
    return jnp.concatenate([jnp.sin(x_proj), jnp.cos(x_proj)], axis=-1)


def marginal_prob_std(x, t, sigma=25.0):
    # TODO(synk): marginal_prob_std is supplied externally to Gen in the original
    # code; the standard VE-SDE perturbation-kernel std is used here.
    std = jnp.sqrt((jnp.exp(2.0 * t * np.log(sigma)) - 1.0) / (2.0 * np.log(sigma)))
    return x, std


# ----------------------------------------------------------------------------
# Pure-JAX reference forward (for the correctness check)
# ----------------------------------------------------------------------------
def multihead_attention(x_cls, x, p, num_heads, mask, linear_fn):
    """nn.MultiheadAttention(batch_first=True) with a length-1 query."""
    B, S, E = x.shape
    Dh = E // num_heads
    q = linear_fn(x_cls, p["wq"], p["bq"])
    k = linear_fn(x, p["wk"], p["bk"])
    v = linear_fn(x, p["wv"], p["bv"])
    qh = q.reshape(B, 1, num_heads, Dh).transpose(0, 2, 1, 3)
    kh = k.reshape(B, S, num_heads, Dh).transpose(0, 2, 1, 3)
    vh = v.reshape(B, S, num_heads, Dh).transpose(0, 2, 1, 3)
    scores = jnp.einsum("bhqd,bhkd->bhqk", qh, kh) / np.sqrt(Dh)
    if mask is not None:
        scores = jnp.where(mask[:, None, None, :], -1e30, scores)
    attn = jax.nn.softmax(scores, axis=-1)
    ctx = jnp.einsum("bhqk,bhkd->bhqd", attn, vh)
    ctx = ctx.transpose(0, 2, 1, 3).reshape(B, 1, E)
    return linear_fn(ctx, p["wo"], p["bo"])


def block_forward(x, x_cls, p, num_heads, mask, linear_fn):
    residual = x
    x_cls_a = multihead_attention(x_cls, x, p, num_heads, mask, linear_fn)
    h_cls = linear_fn(x_cls_a, p["fc1_cls_w"], p["fc1_cls_b"], activation="gelu")
    # NOTE: the original PyTorch forward applies self.fc2 (not fc2_cls) here; preserved.
    x_cls_o = linear_fn(h_cls, p["fc2_w"], p["fc2_b"])
    x = x + x_cls_o
    x = linear_fn(x, p["fc1_w"], p["fc1_b"], activation="gelu")
    x = linear_fn(x, p["fc2_w"], p["fc2_b"])
    return x + residual


def gen_forward(params, x, t, e, mask=None, *, linear_fn, sigma=25.0):
    """Reference Gen.forward: x [B, nhits, n_dim], t [B], e [B] -> [B, nhits, n_dim]."""
    x = linear_fn(x, params["embed_w"], params["embed_b"])

    def time_embed(v):
        h = gaussian_fourier_projection(v, params["gfp_W"])
        return linear_fn(h, params["embed_t_w"], params["embed_t_b"], activation="silu")

    embed_t_ = time_embed(t)
    x = x + linear_fn(embed_t_, params["dense1_w"], params["dense1_b"])[..., None]
    embed_e_ = time_embed(e)
    x = x + linear_fn(embed_e_, params["dense1_w"], params["dense1_b"])[..., None]

    B = x.shape[0]
    l_dim = params["cls_token"].shape[-1]
    x_cls = jnp.broadcast_to(params["cls_token"], (B, 1, l_dim))

    for lp in params["layers"]:
        x = block_forward(x, x_cls, lp, params["num_heads"], mask, linear_fn)

    mean_, std_ = marginal_prob_std(x, t, sigma)
    out = linear_fn(mean_, params["out_w"], params["out_b"])
    return out / std_[:, None, None]


# ----------------------------------------------------------------------------
# Pallas-path forward (pre-prepared weights, lane-padded activation flow)
# ----------------------------------------------------------------------------
def prepare_gen_params(params, compute_dtype=jnp.float32):
    """One-time prep: transpose + pad Pallas-bound weights; fuse k/v into [2E, E].

    For v6e/v7x pass compute_dtype=jnp.bfloat16 (MXU-native operands; f32 acc).
    """
    prep = {
        "embed": prepare_linear(params["embed_w"], params["embed_b"], compute_dtype),
        "out": prepare_linear(params["out_w"], params["out_b"], compute_dtype),
        "layers": [],
    }
    for lp in params["layers"]:
        kv_w = jnp.concatenate([lp["wk"], lp["wv"]], axis=0)   # [2E, E]
        kv_b = jnp.concatenate([lp["bk"], lp["bv"]], axis=0)
        prep["layers"].append({
            "kv": prepare_linear(kv_w, kv_b, compute_dtype),
            "fc1": prepare_linear(lp["fc1_w"], lp["fc1_b"], compute_dtype),
            "fc2": prepare_linear(lp["fc2_w"], lp["fc2_b"], compute_dtype),
        })
    return prep


def gen_forward_pallas(params, prep, x, t, e, mask=None, sigma=25.0):
    """Gen.forward with the Pallas linear kernel for every hit-wise GEMM.

    Activations stay lane-padded (width 128) end-to-end; weight-padding zeros
    guarantee the padded lanes never contaminate real outputs.
    """
    B, S, n_dim = x.shape
    E = params["cls_token"].shape[-1]
    H = params["num_heads"]
    Dh = E // H

    # input embedding over all hits (Pallas; pads the n_dim=4 feature axis once)
    h = linear_prepped(x.astype(jnp.float32), prep["embed"])          # [B, S, 128]
    Ep = h.shape[-1]

    # time / energy embeddings (M = B = 2 -> plain JAX per perf review)
    def time_embed(v):
        g = gaussian_fourier_projection(v, params["gfp_W"])
        return linear_ref(g, params["embed_t_w"], params["embed_t_b"], activation="silu")

    embed_t_ = time_embed(t)
    embed_e_ = time_embed(e)
    d_t = linear_ref(embed_t_, params["dense1_w"], params["dense1_b"])[..., None]
    d_e = linear_ref(embed_e_, params["dense1_w"], params["dense1_b"])[..., None]
    h = h + d_t + d_e   # broadcast over hits & features; padded-lane values are
                        # harmless (every downstream weight has zero padded-K rows)

    x_cls = jnp.broadcast_to(params["cls_token"], (B, 1, E)).astype(jnp.float32)

    for li, lp in enumerate(params["layers"]):
        pp = prep["layers"][li]
        residual = h

        # fused K/V projection over all hits: ONE Pallas call per block.
        kv = linear_prepped(h, pp["kv"])                              # [B, S, 128]
        k = kv[..., :E]
        v = kv[..., E:2 * E]
        # length-1-query projection (M = B = 2) stays in plain JAX.
        q = linear_ref(x_cls, lp["wq"], lp["bq"])                     # [B, 1, E]

        qh = q.reshape(B, 1, H, Dh).transpose(0, 2, 1, 3)
        kh = k.reshape(B, S, H, Dh).transpose(0, 2, 1, 3)
        vh = v.reshape(B, S, H, Dh).transpose(0, 2, 1, 3)
        # TODO(synk): single-query attention core kept in plain JAX; far too small for MXU.
        scores = jnp.einsum("bhqd,bhkd->bhqk", qh, kh) / np.sqrt(Dh)
        if mask is not None:
            scores = jnp.where(mask[:, None, None, :], -1e30, scores)
        attn = jax.nn.softmax(scores, axis=-1)
        ctx = jnp.einsum("bhqk,bhkd->bhqd", attn, vh)
        ctx = ctx.transpose(0, 2, 1, 3).reshape(B, 1, E)
        x_cls_a = linear_ref(ctx, lp["wo"], lp["bo"])                 # [B, 1, E]

        # cls-token MLP (M = B = 2 -> plain JAX).  NOTE: original forward uses
        # self.fc2 (not fc2_cls) here; bug preserved.
        h_cls = linear_ref(x_cls_a, lp["fc1_cls_w"], lp["fc1_cls_b"], activation="gelu")
        x_cls_o = linear_ref(h_cls, lp["fc2_w"], lp["fc2_b"])         # [B, 1, E]

        h = h + jnp.pad(x_cls_o, ((0, 0), (0, 0), (0, Ep - E)))       # broadcast add
        h = linear_prepped(h, pp["fc1"], activation="gelu")           # [B, S, 128]
        h = linear_prepped(h, pp["fc2"])                              # [B, S, 128]
        h = h + residual

    mean_, std_ = marginal_prob_std(h, t, sigma)
    out = linear_prepped(mean_, prep["out"])[..., :n_dim]             # [B, S, n_dim]
    return out / std_[:, None, None]


# ----------------------------------------------------------------------------
# Deterministic parameter init (mimicking nn.Linear's uniform(-1/sqrt(in), ...))
# ----------------------------------------------------------------------------
def _linear_init(key, out_dim, in_dim):
    kw, kb = jax.random.split(key)
    bound = 1.0 / np.sqrt(in_dim)
    w = jax.random.uniform(kw, (out_dim, in_dim), jnp.float32, minval=-bound, maxval=bound)
    b = jax.random.uniform(kb, (out_dim,), jnp.float32, minval=-bound, maxval=bound)
    return w, b


def init_gen_params(key, n_dim, l_dim, hidden, num_layers, num_heads):
    p = {}
    key, k1, k2, k3, k4, k5 = jax.random.split(key, 6)
    p["embed_w"], p["embed_b"] = _linear_init(k1, l_dim, n_dim)
    p["gfp_W"] = jax.random.normal(k2, (32,), jnp.float32) * 30.0      # embed_dim=64
    p["embed_t_w"], p["embed_t_b"] = _linear_init(k3, 64, 64)
    p["dense1_w"], p["dense1_b"] = _linear_init(k4, 1, 64)
    p["out_w"], p["out_b"] = _linear_init(k5, n_dim, l_dim)
    p["cls_token"] = jnp.ones((1, 1, l_dim), jnp.float32)
    p["num_heads"] = num_heads
    layers = []
    for _ in range(num_layers):
        key, ka, kb, kc, kd, ke_, kf, kg, kh = jax.random.split(key, 9)
        lp = {}
        lp["wq"], lp["bq"] = _linear_init(ka, l_dim, l_dim)
        lp["wk"], lp["bk"] = _linear_init(kb, l_dim, l_dim)
        lp["wv"], lp["bv"] = _linear_init(kc, l_dim, l_dim)
        lp["wo"], lp["bo"] = _linear_init(kd, l_dim, l_dim)
        lp["fc1_w"], lp["fc1_b"] = _linear_init(ke_, hidden, l_dim)
        lp["fc2_w"], lp["fc2_b"] = _linear_init(kf, l_dim, hidden)
        lp["fc1_cls_w"], lp["fc1_cls_b"] = _linear_init(kg, hidden, l_dim)
        # fc2_cls exists in the PyTorch module but is unused by its forward (bug preserved).
        lp["fc2_cls_w"], lp["fc2_cls_b"] = _linear_init(kh, l_dim, hidden)
        layers.append(lp)
    p["layers"] = layers
    return p, key


# ----------------------------------------------------------------------------
if __name__ == "__main__":
    n_dim, l_dim_gen, hidden_gen, num_layers_gen, heads_gen = 4, 32, 64, 2, 4
    batch, nhits = 2, 8

    key = jax.random.PRNGKey(0)
    params, key = init_gen_params(key, n_dim, l_dim_gen, hidden_gen,
                                  num_layers_gen, heads_gen)
    prep = prepare_gen_params(params)   # one-time weight transpose/pad/fuse

    kx, kt, ke = jax.random.split(key, 3)
    x = jax.random.normal(kx, (batch, nhits, n_dim), jnp.float32)
    t = jax.random.uniform(kt, (batch,), jnp.float32, minval=0.1, maxval=1.0)
    e = jax.random.uniform(ke, (batch,), jnp.float32, minval=0.1, maxval=1.0)

    out = gen_forward_pallas(params, prep, x, t, e)
    out = jax.block_until_ready(out)
    assert out.shape == (batch, nhits, n_dim), out.shape

    # Correctness check against a pure-JAX reference of the same forward pass.
    ref = gen_forward(params, x, t, e, linear_fn=linear_ref)
    ref = jax.block_until_ready(ref)
    np.testing.assert_allclose(np.asarray(out), np.asarray(ref), rtol=1e-3, atol=1e-3)

    # Secondary check: exercise the multi-K-step accumulator path of the kernel.
    km0, km1, km2 = jax.random.split(kx, 3)
    xa = jax.random.normal(km0, (16, 1024), jnp.float32) / np.sqrt(1024.0)
    wa = jax.random.normal(km1, (64, 1024), jnp.float32) / np.sqrt(1024.0)
    ba = jax.random.normal(km2, (64,), jnp.float32)
    pa = prepare_linear(wa, ba)
    ya = jax.block_until_ready(linear_prepped(xa, pa, activation="gelu"))[..., :64]
    ya_ref = linear_ref(xa, wa, ba, activation="gelu")
    np.testing.assert_allclose(np.asarray(ya), np.asarray(ya_ref), rtol=1e-3, atol=1e-3)

    print("KERNEL_OK")
</pallas_src>

<mosaic_0001>
module attributes {stable_mosaic.version = 11 : i64} {
  func.func @_linear_k1_kernel(%arg0: i32, %arg1: i32, %arg2: memref<8x128xf32, #tpu.memory_space<vmem>>, %arg3: memref<128x128xf32, #tpu.memory_space<vmem>>, %arg4: memref<1x128xf32, #tpu.memory_space<vmem>>, %arg5: memref<8x128xf32, #tpu.memory_space<vmem>>) attributes {dimension_semantics = [#tpu.dimension_semantics<parallel>, #tpu.dimension_semantics<parallel>], iteration_bounds = array<i64: 2, 1>, scalar_prefetch = 0 : i64, scratch_operands = 0 : i64, tpu.core_type = #tpu.core_type<tc>, window_params = [{transform_indices = @transform_0, window_bounds = array<i64: 8, 128>}, {transform_indices = @transform_1, window_bounds = array<i64: 128, 128>}, {transform_indices = @transform_2, window_bounds = array<i64: 1, 128>}, {transform_indices = @transform_3, window_bounds = array<i64: 8, 128>}]} {
    %c0 = arith.constant 0 : index
    %c0_0 = arith.constant 0 : index
    %0 = vector.load %arg2[%c0, %c0_0] : memref<8x128xf32, #tpu.memory_space<vmem>>, vector<8x128xf32>
    %c0_1 = arith.constant 0 : index
    %c0_2 = arith.constant 0 : index
    %1 = vector.load %arg3[%c0_1, %c0_2] : memref<128x128xf32, #tpu.memory_space<vmem>>, vector<128x128xf32>
    %cst = arith.constant dense<0.000000e+00> : vector<8x128xf32>
    %2 = tpu.matmul %0, %1, %cst {dimension_numbers = #tpu.dot_dimension_numbers<[1], [0], [0], [1], [0, 0, 1, 1], [], []>} : vector<8x128xf32>, vector<128x128xf32>, vector<8x128xf32> -> vector<8x128xf32>
    %c0_3 = arith.constant 0 : index
    %c0_4 = arith.constant 0 : index
    %3 = vector.load %arg4[%c0_3, %c0_4] : memref<1x128xf32, #tpu.memory_space<vmem>>, vector<1x128xf32>
    %4 = vector.broadcast %3 : vector<1x128xf32> to vector<8x128xf32>
    %5 = arith.addf %2, %4 : vector<8x128xf32>
    %c0_5 = arith.constant 0 : index
    %c0_6 = arith.constant 0 : index
    %6 = vector.load %arg5[%c0_5, %c0_6] : memref<8x128xf32, #tpu.memory_space<vmem>>, vector<8x128xf32>
    tpu.vector_store %arg5[%c0_5, %c0_6], %5 {strides = array<i32>} : memref<8x128xf32, #tpu.memory_space<vmem>>, vector<8x128xf32>,
    return
  }
  func.func @transform_0(%arg0: i32, %arg1: i32) -> (i32, i32) {
    %c0_i32 = arith.constant 0 : i32
    %c0_i32_0 = arith.constant 0 : i32
    return %arg0, %c0_i32 : i32, i32
  }
  func.func @transform_1(%arg0: i32, %arg1: i32) -> (i32, i32) {
    %c0_i32 = arith.constant 0 : i32
    %c0_i32_0 = arith.constant 0 : i32
    return %c0_i32, %arg1 : i32, i32
  }
  func.func @transform_2(%arg0: i32, %arg1: i32) -> (i32, i32) {
    %c0_i32 = arith.constant 0 : i32
    %c0_i32_0 = arith.constant 0 : i32
    return %c0_i32, %arg1 : i32, i32
  }
  func.func @transform_3(%arg0: i32, %arg1: i32) -> (i32, i32) {
    %c0_i32 = arith.constant 0 : i32
    return %arg0, %arg1 : i32, i32
  }
}

</mosaic_0001>

<llo_original>
// kernel: tpu_custom_call.1
$region0: #{tpu_custom_call.1}
  #allocation0 [shape = 'u32[]', space=smem, size = 0x4, offset = 0x4, fixed_abs, tag = 'smem constant byte address 0x4 - core index']
  #allocation1 [shape = 'u32[144,128]{1,0:T(1,128)}', space=vmem, size = 0x12000, scoped, tag = 'internal scratch']
  %s0 = inlined_call_operand.hbm [shape: f32[16,128], index: 0, kind: input, shape index: {}]
  %s1 = inlined_call_operand.hbm [shape: f32[128,128], index: 1, kind: input, shape index: {}]
  %s2 = inlined_call_operand.vmem [shape: f32[1,128], index: 2, kind: input, shape index: {}]
  %s3 = inlined_call_operand.hbm [shape: f32[16,128], index: 3, kind: output, shape index: {}]
  %s4 = sld [smem:[#allocation0]]
  $region53: #{tpu_custom_call.1} parent=0
    _
  %s6 = ssub.s32 1, %s4
  %s7 = scalar_select 0, %s6, %s4
  $region1: #{tpu_custom_call.1} parent=0
    #allocation2 [shape = 'u8[8192]{0}', space=vmem, size = 0x2000, scoped, tag = 'input window, operand 0']
    #allocation3 [shape = 's32[2]{0}', space=sflag, size = 0x8, scoped, tag = 'scoped memory for tpu_custom_call.1']
    #allocation4 [shape = 's32[2]{0}', space=sflag, size = 0x8, scoped, tag = 'scoped memory for tpu_custom_call.1']
    #allocation5 [shape = 'u8[65536]{0}', space=vmem, size = 0x10000, scoped, tag = 'input window, operand 1, single buffered']
    #allocation6 [shape = 's32[1]{0}', space=sflag, size = 0x4, scoped, tag = 'scoped memory for tpu_custom_call.1']
    #allocation7 [shape = 'u8[8192]{0}', space=vmem, size = 0x2000, scoped, tag = 'output window, operand 0']
    %8 = vsyncpa [#allocation3], 0
    %s9 = scalar_lea.sflag [#allocation3], 1
    %10 = vsyncpa %s9, 0
    %11 = vsyncpa [#allocation6], 0
    %12 = vsyncpa [#allocation4], 0
    %s13 = scalar_lea.sflag [#allocation4], 1
    %14 = vsyncpa %s13, 0
    loop: start=0, step=1, limit=4
    $region2: #{tpu_custom_call.1} parent=1 // loop_pre_header
      _
    $region3: #{tpu_custom_call.1} parent=1 // loop_header
      %s16 = sphi 0, %s20
      %p17 = scmp.ge.s32.totalorder %s16, 4
      %s23 = sphi 0, %s35
      %s24 = sphi 0, %s31
      %s25 = sphi 0, %s23
      %s26 = sphi 0, %s24
      %s27 = sphi 0, %s25
      %s28 = sphi 0, %s26
      %s38 = sphi 0, %s40
      %s41 = sphi 0, %s38
      %s42 = sphi 0, %s41
      %s58 = sphi 0, %s42
      %s64 = sphi 0, %s66
      %s67 = sphi 0, %s64
      %s68 = sphi 0, %s67
      %s84 = sphi 0, %s68
      %s90 = sphi 0, %s92
      %s93 = sphi 0, %s90
      %s94 = sphi 0, %s93
      %s110 = sphi 0, %s94
      %s118 = sphi 0, %s120
      %s121 = sphi 0, %s118
      %s122 = sphi 0, %s121
      %s138 = sphi 0, %s122
    $region4: #{tpu_custom_call.1} parent=1 // loop_header_branch
      %19 = sbr.rel (%p17) target = $region8
    $region5: #{tpu_custom_call.1} parent=1 // loop_body
      %s21 = ssub.s32 %s16, 1
      %s22 = ssub.s32 %s16, 2
      %s29 = sadd.s32 1, %s24
      %p30 = scmp.ge.s32.totalorder %s29, 1
      %s31 = scalar_select %p30, 0, %s29
      %s32 = sadd.s32 1, %s23
      %s33 = scalar_select %p30, %s32, %s23
      %p34 = scmp.ge.s32.totalorder %s33, 2
      %s35 = scalar_select %p34, 0, %s33
      %s36 = ssub.s32 %s23, %s35
      %p37 = scmp.eq.s32.totalorder %s36, 0
      %s39 = sadd.s32 %s38, 1
      %s40 = scalar_select %p37, %s38, %s39
      %p43 = pneg %p37
      %p44 = scmp.eq.s32.totalorder %s16, 1
      %p45 = por %p43, %p44
      %p46 = scmp.ne.s32.totalorder %s38, %s41
      %p47 = scmp.eq.s32.totalorder %s16, 0
      %p48 = por %p46, %p47
      %p49 = scmp.ne.s32.totalorder %s38, %s41
      %p50 = scmp.eq.s32.totalorder %s21, 1
      %p51 = por %p49, %p50
      %p52 = scmp.ne.s32.totalorder %s41, %s42
      %p53 = scmp.eq.s32.totalorder %s21, 0
      %p54 = por %p52, %p53
      %p55 = scmp.ne.s32.totalorder %s41, %s42
      %p56 = scmp.eq.s32.totalorder %s22, 1
      %p57 = por %p55, %p56
      %p59 = scmp.ne.s32.totalorder %s42, %s58
      %p60 = scmp.eq.s32.totalorder %s22, 0
      %p61 = por %p59, %p60
      %s62 = ssub.s32 %s24, %s31
      %p63 = scmp.eq.s32.totalorder %s62, 0
      %s65 = sadd.s32 %s64, 1
      %s66 = scalar_select %p63, %s64, %s65
      %p69 = pneg %p63
      %p70 = scmp.eq.s32.totalorder %s16, 1
      %p71 = por %p69, %p70
      %p72 = scmp.ne.s32.totalorder %s64, %s67
      %p73 = scmp.eq.s32.totalorder %s16, 0
      %p74 = por %p72, %p73
      %p75 = scmp.ne.s32.totalorder %s64, %s67
      %p76 = scmp.eq.s32.totalorder %s21, 1
      %p77 = por %p75, %p76
      %p78 = scmp.ne.s32.totalorder %s67, %s68
      %p79 = scmp.eq.s32.totalorder %s21, 0
      %p80 = por %p78, %p79
      %p81 = scmp.ne.s32.totalorder %s67, %s68
      %p82 = scmp.eq.s32.totalorder %s22, 1
      %p83 = por %p81, %p82
      %p85 = scmp.ne.s32.totalorder %s68, %s84
      %p86 = scmp.eq.s32.totalorder %s22, 0
      %p87 = por %p85, %p86
      %s88 = ssub.s32 %s24, %s31
      %p89 = scmp.eq.s32.totalorder %s88, 0
      %s91 = sadd.s32 %s90, 1
      %s92 = scalar_select %p89, %s90, %s91
      %p95 = pneg %p89
      %p96 = scmp.eq.s32.totalorder %s16, 1
      %p97 = por %p95, %p96
      %p98 = scmp.ne.s32.totalorder %s90, %s93
      %p99 = scmp.eq.s32.totalorder %s16, 0
      %p100 = por %p98, %p99
      %p101 = scmp.ne.s32.totalorder %s90, %s93
      %p102 = scmp.eq.s32.totalorder %s21, 1
      %p103 = por %p101, %p102
      %p104 = scmp.ne.s32.totalorder %s93, %s94
      %p105 = scmp.eq.s32.totalorder %s21, 0
      %p106 = por %p104, %p105
      %p107 = scmp.ne.s32.totalorder %s93, %s94
      %p108 = scmp.eq.s32.totalorder %s22, 1
      %p109 = por %p107, %p108
      %p111 = scmp.ne.s32.totalorder %s94, %s110
      %p112 = scmp.eq.s32.totalorder %s22, 0
      %p113 = por %p111, %p112
      %s114 = ssub.s32 %s23, %s35
      %s115 = ssub.s32 %s24, %s31
      %s116 = sor.u32 %s114, %s115
      %p117 = scmp.eq.s32.totalorder %s116, 0
      %s119 = sadd.s32 %s118, 1
      %s120 = scalar_select %p117, %s118, %s119
      %p123 = pneg %p117
      %p124 = scmp.eq.s32.totalorder %s16, 1
      %p125 = por %p123, %p124
      %p126 = scmp.ne.s32.totalorder %s118, %s121
      %p127 = scmp.eq.s32.totalorder %s16, 0
      %p128 = por %p126, %p127
      %p129 = scmp.ne.s32.totalorder %s118, %s121
      %p130 = scmp.eq.s32.totalorder %s21, 1
      %p131 = por %p129, %p130
      %p132 = scmp.ne.s32.totalorder %s121, %s122
      %p133 = scmp.eq.s32.totalorder %s21, 0
      %p134 = por %p132, %p133
      %p135 = scmp.ne.s32.totalorder %s121, %s122
      %p136 = scmp.eq.s32.totalorder %s22, 1
      %p137 = por %p135, %p136
      %p139 = scmp.ne.s32.totalorder %s122, %s138
      %p140 = scmp.eq.s32.totalorder %s22, 0
      %p141 = por %p139, %p140
      %p142 = scmp.le.s32.totalorder 1, %s16
      %p143 = scmp.lt.s32.totalorder %s16, 3
      %p144 = pnand %p142, %p143
      %p145 = pneg %p144
      // Predicated region
      $region9: #{tpu_custom_call.1} parent=5 // pred_check
        _
      $region10: #{tpu_custom_call.1} parent=5 // pred_check_branch
        %147 = sbr.rel (%p144) target = $region12
      $region11: #{tpu_custom_call.1} parent=5 // pred_region
        %s148 = ssub.s32 %s16, 1
        // Predicated region
        $region13: #{tpu_custom_call.1} parent=11 // pred_check
          %p149 = pneg %p80
        $region14: #{tpu_custom_call.1} parent=11 // pred_check_branch
          %151 = sbr.rel (%p149) target = $region16
        $region15: #{tpu_custom_call.1} parent=11 // pred_region
          %s153 = ssub.s32 2048, 2048
          %154 = vsyncadd [#allocation6], %s153
          %s155 = smul.addr %s26, 128
          %s156 = scalar_lea.hbm %s1, %s155
          %s157 = sshll.u32 [#allocation5], 4
          %s158 = int_to_ptr.vmem [resolvable:$true] %s157
          %163 = dma.hbm_to_vmem [thread:$0]  %s156, 2048, %s158, [#allocation6], 128, 128, 8
        $region16: #{tpu_custom_call.1} parent=11 // pred_fallthru
          _
        // Predicated region
        $region17: #{tpu_custom_call.1} parent=11 // pred_check
          %p164 = pneg %p106
        $region18: #{tpu_custom_call.1} parent=11 // pred_check_branch
          %166 = sbr.rel (%p164) target = $region20
        $region19: #{tpu_custom_call.1} parent=11 // pred_region
          %p167 = scmp.lt.s32.totalorder %s26, 0
          %s168 = scalar_select %p167, %s26, 0
          %s169 = scalar_lea.vmem %s2, %s168
        $region20: #{tpu_custom_call.1} parent=11 // pred_fallthru
          _
      $region12: #{tpu_custom_call.1} parent=5 // pred_fallthru
        _
      %p170 = scmp.lt.s32.totalorder %s16, 2
      // Predicated region
      $region21: #{tpu_custom_call.1} parent=5 // pred_check
        %p171 = pneg %p170
      $region22: #{tpu_custom_call.1} parent=5 // pred_check_branch
        %173 = sbr.rel (%p171) target = $region24
      $region23: #{tpu_custom_call.1} parent=5 // pred_region
        // Predicated region
        $region25: #{tpu_custom_call.1} parent=23 // pred_check
          %p174 = pneg %p48
        $region26: #{tpu_custom_call.1} parent=23 // pred_check_branch
          %176 = sbr.rel (%p174) target = $region28
        $region27: #{tpu_custom_call.1} parent=23 // pred_region
          %s177 = sand.u32 %s38, 1
          %s178 = scalar_lea.sflag [#allocation3], %s177
          %s179 = sand.u32 %s38, 1
          %s180 = smul.addr %s179, 8
          %s181 = scalar_lea.vmem [#allocation2], %s180
          %s183 = ssub.s32 128, 128
          %184 = vsyncadd %s178, %s183
          %s185 = smul.addr %s23, 128
          %s186 = scalar_lea.hbm %s0, %s185
          %s188 = sshll.u32 %s181, 4
          %s189 = int_to_ptr.vmem [resolvable:$true] %s188
          %191 = dma.hbm_to_vmem [thread:$0]  %s186, 128, %s189, %s178
        $region28: #{tpu_custom_call.1} parent=23 // pred_fallthru
          _
      $region24: #{tpu_custom_call.1} parent=5 // pred_fallthru
        _
      %p192 = scmp.le.s32.totalorder 1, %s16
      %p193 = scmp.lt.s32.totalorder %s16, 3
      %p194 = pnand %p192, %p193
      %p195 = pneg %p194
      // Predicated region
      $region29: #{tpu_custom_call.1} parent=5 // pred_check
        _
      $region30: #{tpu_custom_call.1} parent=5 // pred_check_branch
        %197 = sbr.rel (%p194) target = $region32
      $region31: #{tpu_custom_call.1} parent=5 // pred_region
        %s198 = ssub.s32 %s16, 1
        %s199 = sand.u32 %s41, 1
        %s200 = scalar_lea.sflag [#allocation3], %s199
        %s201 = sand.u32 %s41, 1
        %s202 = smul.addr %s201, 8
        %s203 = scalar_lea.vmem [#allocation2], %s202
        // Predicated region
        $region33: #{tpu_custom_call.1} parent=31 // pred_check
          %p204 = pneg %p54
        $region34: #{tpu_custom_call.1} parent=31 // pred_check_branch
          %206 = sbr.rel (%p204) target = $region36
        $region35: #{tpu_custom_call.1} parent=31 // pred_region
          %207 = dma.done %s200, 128
        $region36: #{tpu_custom_call.1} parent=31 // pred_fallthru
          _
        // Predicated region
        $region37: #{tpu_custom_call.1} parent=31 // pred_check
          %p208 = pneg %p80
        $region38: #{tpu_custom_call.1} parent=31 // pred_check_branch
          %210 = sbr.rel (%p208) target = $region40
        $region39: #{tpu_custom_call.1} parent=31 // pred_region
          %211 = dma.done [#allocation6], 2048
        $region40: #{tpu_custom_call.1} parent=31 // pred_fallthru
          _
        %s212 = sand.u32 %s41, 1
        %s213 = scalar_lea.sflag [#allocation3], %s212
        %s214 = sand.u32 %s41, 1
        %s215 = smul.addr %s214, 8
        %s216 = scalar_lea.vmem [#allocation2], %s215
        %p217 = pneg %p54
        %p218 = pneg %p51
        %p219 = pneg %p80
        %p220 = pneg %p77
        %p221 = scmp.lt.s32.totalorder %s26, 0
        %s222 = scalar_select %p221, %s26, 0
        %s223 = scalar_lea.vmem %s2, %s222
        %p224 = pneg %p106
        %p225 = pneg %p103
        %p226 = pneg %p134
        %p227 = pneg %p131
        %s228 = sand.u32 %s121, 1
        %s229 = scalar_lea.sflag [#allocation4], %s228
        %s230 = sand.u32 %s121, 1
        %s231 = smul.addr %s230, 8
        %s232 = scalar_lea.vmem [#allocation7], %s231
        %p233 = scmp.lt.s32.totalorder %s26, 0
        %s234 = scalar_select %p233, %s26, 0
        %s235 = scalar_lea.vmem %s2, %s234
        %v236 = vld [vmem:[%s203] sm:$0xff]
        %v237 = vld [vmem:[#allocation5] sm:$0xff]
        %v238 = vld [vmem:[#allocation5 + $0x8] sm:$0xff]
        %v239 = vld [vmem:[#allocation5 + $0x10] sm:$0xff]
        %v240 = vld [vmem:[#allocation5 + $0x18] sm:$0xff]
        %v241 = vld [vmem:[#allocation5 + $0x20] sm:$0xff]
        %v242 = vld [vmem:[#allocation5 + $0x28] sm:$0xff]
        %v243 = vld [vmem:[#allocation5 + $0x30] sm:$0xff]
        %v244 = vld [vmem:[#allocation5 + $0x38] sm:$0xff]
        %v245 = vld [vmem:[#allocation5 + $0x40] sm:$0xff]
        %v246 = vld [vmem:[#allocation5 + $0x48] sm:$0xff]
        %v247 = vld [vmem:[#allocation5 + $0x50] sm:$0xff]
        %v248 = vld [vmem:[#allocation5 + $0x58] sm:$0xff]
        %v249 = vld [vmem:[#allocation5 + $0x60] sm:$0xff]
        %v250 = vld [vmem:[#allocation5 + $0x68] sm:$0xff]
        %v251 = vld [vmem:[#allocation5 + $0x70] sm:$0xff]
        %v252 = vld [vmem:[#allocation5 + $0x78] sm:$0xff]
        %v253 = vld [vmem:[%s235] sm:$0x1]
        %v255 = vlaneseq
        %v256 = vshrl.u32 %v255, 7
        %v257 = vsub.s32 0, %v256
        %v258 = vrot.slane %v253, %v257
        %260 = vmatprep.subr.mxu0 0.0
        %261 = vmatpush1.msra.mxu0 %v237
        %262 = vmatprep.subr.mxu0 0.0
        %263 = vmatpush1.msra.mxu0 %v238
        %264 = vmatprep.subr.mxu0 0.0
        %265 = vmatpush1.msra.mxu0 %v239
        %266 = vmatprep.subr.mxu0 0.0
        %267 = vmatpush1.msra.mxu0 %v240
        %268 = vmatprep.subr.mxu0 0.0
        %269 = vmatpush1.msra.mxu0 %v241
        %270 = vmatprep.subr.mxu0 0.0
        %271 = vmatpush1.msra.mxu0 %v242
        %272 = vmatprep.subr.mxu0 0.0
        %273 = vmatpush1.msra.mxu0 %v243
        %274 = vmatprep.subr.mxu0 0.0
        %275 = vmatpush1.msra.mxu0 %v244
        %276 = vmatprep.subr.mxu0 0.0
        %277 = vmatpush1.msra.mxu0 %v245
        %278 = vmatprep.subr.mxu0 0.0
        %279 = vmatpush1.msra.mxu0 %v246
        %280 = vmatprep.subr.mxu0 0.0
        %281 = vmatpush1.msra.mxu0 %v247
        %282 = vmatprep.subr.mxu0 0.0
        %283 = vmatpush1.msra.mxu0 %v248
        %284 = vmatprep.subr.mxu0 0.0
        %285 = vmatpush1.msra.mxu0 %v249
        %286 = vmatprep.subr.mxu0 0.0
        %287 = vmatpush1.msra.mxu0 %v250
        %288 = vmatprep.subr.mxu0 0.0
        %289 = vmatpush1.msra.mxu0 %v251
        %290 = vmatprep.subr.mxu0 0.0
        %291 = vmatpush1.msra.mxu0 %v252
        %292 = vmatprep.subr.mxu0 0.0
        %293 = vmatpush1.msra.mxu0 0.0
        %294 = vmatprep.subr.mxu0 0.0
        %295 = vmatpush1.msra.mxu0 0.0
        %296 = vmatprep.subr.mxu0 0.0
        %297 = vmatpush1.msra.mxu0 0.0
        %298 = vmatprep.subr.mxu0 0.0
        %299 = vmatpush1.msra.mxu0 0.0
        %300 = vmatprep.subr.mxu0 0.0
        %301 = vmatpush1.msra.mxu0 0.0
        %302 = vmatprep.subr.mxu0 0.0
        %303 = vmatpush1.msra.mxu0 0.0
        %304 = vmatprep.subr.mxu0 0.0
        %305 = vmatpush1.msra.mxu0 0.0
        %306 = vmatprep.subr.mxu0 0.0
        %307 = vmatpush1.msra.mxu0 0.0
        %308 = vmatprep.subr.mxu0 0.0
        %309 = vmatpush1.msra.mxu0 0.0
        %310 = vmatprep.subr.mxu0 0.0
        %311 = vmatpush1.msra.mxu0 0.0
        %312 = vmatprep.subr.mxu0 0.0
        %313 = vmatpush1.msra.mxu0 0.0
        %314 = vmatprep.subr.mxu0 0.0
        %315 = vmatpush1.msra.mxu0 0.0
        %316 = vmatprep.subr.mxu0 0.0
        %317 = vmatpush1.msra.mxu0 0.0
        %318 = vmatprep.subr.mxu0 0.0
        %319 = vmatpush1.msra.mxu0 0.0
        %320 = vmatprep.subr.mxu0 0.0
        %321 = vmatpush1.msra.mxu0 0.0
        %322 = vmatprep.subr.mxu0 0.0
        %323 = vmatpush1.msra.mxu0 0.0
        %324 = vmatprep.mubr.f32.mxu0 0.0
        %325 = vmatmul.mubr.f32.gmra.mrb[0].mxu0 %v236
        %v326 = vpop.f32.mrb[0].mxu0
        %v327 = vadd.f32 %v258, %v326
        %v328 = vpop.f32.mrb[0].mxu0
        %329 = vdwg.mxu0
        %330 = vst [vmem:[%s232] sm:$0xff] %v327
        %s331 = sand.u32 %s121, 1
        %s332 = scalar_lea.sflag [#allocation4], %s331
        %s333 = sand.u32 %s121, 1
        %s334 = smul.addr %s333, 8
        %s335 = scalar_lea.vmem [#allocation7], %s334
        // Predicated region
        $region41: #{tpu_custom_call.1} parent=31 // pred_check
          %p336 = pneg %p131
        $region42: #{tpu_custom_call.1} parent=31 // pred_check_branch
          %338 = sbr.rel (%p336) target = $region44
        $region43: #{tpu_custom_call.1} parent=31 // pred_region
          %s340 = ssub.s32 128, 128
          %341 = vsyncadd %s332, %s340
          %s342 = sadd.s32 %s26, %s25
          %s343 = smul.addr %s342, 128
          %s344 = scalar_lea.hbm %s3, %s343
          %s346 = sshll.u32 %s335, 4
          %s347 = int_to_ptr.vmem [resolvable:$true] %s346
          %349 = dma.vmem_to_hbm [thread:$0]  %s347, 128, %s344, %s332
        $region44: #{tpu_custom_call.1} parent=31 // pred_fallthru
          _
      $region32: #{tpu_custom_call.1} parent=5 // pred_fallthru
        _
      %p350 = scmp.le.s32.totalorder 2, %s16
      // Predicated region
      $region45: #{tpu_custom_call.1} parent=5 // pred_check
        %p351 = pneg %p350
      $region46: #{tpu_custom_call.1} parent=5 // pred_check_branch
        %353 = sbr.rel (%p351) target = $region48
      $region47: #{tpu_custom_call.1} parent=5 // pred_region
        %s354 = ssub.s32 %s16, 2
        // Predicated region
        $region49: #{tpu_custom_call.1} parent=47 // pred_check
          %p355 = pneg %p137
        $region50: #{tpu_custom_call.1} parent=47 // pred_check_branch
          %357 = sbr.rel (%p355) target = $region52
        $region51: #{tpu_custom_call.1} parent=47 // pred_region
          %s358 = sand.u32 %s122, 1
          %s359 = scalar_lea.sflag [#allocation4], %s358
          %s360 = sand.u32 %s122, 1
          %s361 = smul.addr %s360, 8
          %s362 = scalar_lea.vmem [#allocation7], %s361
          %363 = dma.done %s359, 128
        $region52: #{tpu_custom_call.1} parent=47 // pred_fallthru
          _
      $region48: #{tpu_custom_call.1} parent=5 // pred_fallthru
        _
    $region6: #{tpu_custom_call.1} parent=1 // loop_footer
      %s20 = sadd.s32 1, %s16
    $region7: #{tpu_custom_call.1} parent=1 // loop_footer_branch
      %15 = sbr.rel target = $region3
    $region8: #{tpu_custom_call.1} parent=1 // loop_exit
      _
    %364 = vsyncpa [#allocation3], 1
    %s365 = scalar_lea.sflag [#allocation3], 1
    %366 = vsyncpa %s365, 1
    %367 = vsyncpa [#allocation6], 1
    %368 = vsyncpa [#allocation4], 1
    %s369 = scalar_lea.sflag [#allocation4], 1
    %370 = vsyncpa %s369, 1

</llo_original>
